<compile_context>
chip_gen: v7x
topology: tpu7x:2x2x1
jax: 0.10.0
libtpu: 0.0.40
codegen_flags: <defaults>
</compile_context>

<pallas_src>
import jax
import jax.numpy as jnp
from jax.experimental import pallas as pl
from jax.experimental.pallas import tpu as pltpu


def _round_up(v, m):
    return ((v + m - 1) // m) * m


def fc_network_kernel(x_ref, w0_ref, b0_ref, w1_ref, b1_ref, w2_ref, b2_ref,
                      o_ref):
    def sigmoid(h):
        # sigmoid(h) = 0.5*(tanh(0.5*h)+1): single EUP transcendental, no
        # exact VPU divide.  ULP-level identical to the logistic form.
        return 0.5 * (jnp.tanh(0.5 * h) + 1.0)

    # Hidden layer 0: linear + sigmoid (input normalization pre-folded into
    # w0/b0), MXU matmul with f32 accumulation.
    h = jnp.dot(x_ref[...], w0_ref[...],
                preferred_element_type=jnp.float32) + b0_ref[...]
    h = sigmoid(h)

    # Hidden layer 1: linear + sigmoid.
    h = jnp.dot(h, w1_ref[...],
                preferred_element_type=jnp.float32) + b1_ref[...]
    h = sigmoid(h)

    # Output layer: linear only (output scale/shift pre-folded into w2/b2).
    # Stored at the true act_dim width -- no lane padding, no wrapper slice.
    o_ref[...] = jnp.dot(h, w2_ref[...],
                         preferred_element_type=jnp.float32) + b2_ref[...]


def fold_params(params):
    """One-time host-side transform.

    Folds the input normalization into (w0, b0) and the output affine into
    (w2, b2).  No column padding: the kernel emits the true act_dim width.
    """
    inv_scale = 1.0 / (params["in_scale"] + 1e-8)            # (1, obs_dim)
    w0 = params["w0"] * inv_scale.T                          # scale rows of W0
    b0 = params["b0"] - (params["in_shift"] * inv_scale) @ params["w0"]

    w2 = params["w2"] * params["out_scale"]                  # scale cols of W2
    b2 = params["b2"] * params["out_scale"] + params["out_shift"]

    return {
        "w0": w0, "b0": b0,
        "w1": params["w1"], "b1": params["b1"],
        "w2": w2, "b2": b2,
    }


def fc_network_forward(x, folded, *, block_b=2048):
    """Runs the folded FCNetwork forward pass in a single Pallas kernel.

    x: (B, obs_dim) float32
    folded: output of fold_params().
    """
    B, obs_dim = x.shape
    act_dim = folded["w2"].shape[1]

    # Batch tile: large (amortize per-grid-step overhead), multiple of 8, and
    # capped at ~B/2 so the grid has >= 2 parallel steps -> both TensorCores
    # get work on v7x megacore.
    block_b = max(8, (block_b // 8) * 8)
    tb = min(block_b, _round_up(pl.cdiv(B, 2), 8))
    tb = max(tb, 8)
    if tb >= B:
        tb = B                     # single step; full-extent block is legal
    grid = (pl.cdiv(B, tb),)

    def full(arr):
        # Whole (small) parameter array resident in VMEM; constant index_map
        # means Mosaic does not re-fetch it per grid step.
        shape = arr.shape
        return pl.BlockSpec(shape, lambda i, _s=shape: (0,) * len(_s))

    in_specs = [
        pl.BlockSpec((tb, obs_dim), lambda i: (i, 0)),        # x: tiled over batch
        full(folded["w0"]), full(folded["b0"]),
        full(folded["w1"]), full(folded["b1"]),
        full(folded["w2"]), full(folded["b2"]),
    ]
    out_specs = pl.BlockSpec((tb, act_dim), lambda i: (i, 0))

    return pl.pallas_call(
        fc_network_kernel,
        out_shape=jax.ShapeDtypeStruct((B, act_dim), jnp.float32),
        grid_spec=pltpu.PrefetchScalarGridSpec(
            num_scalar_prefetch=0,
            grid=grid,
            in_specs=in_specs,
            out_specs=out_specs,
        ),
        compiler_params=pltpu.CompilerParams(
            dimension_semantics=("parallel",)),
    )(x, folded["w0"], folded["b0"], folded["w1"], folded["b1"],
      folded["w2"], folded["b2"])


def init_params(key, obs_dim, act_dim, hidden_sizes=(64, 64),
                with_transforms=True):
    """nn.Linear-style U(-1/sqrt(fan_in), 1/sqrt(fan_in)) init, plus
    (optionally non-trivial) input/output transformations."""
    layer_sizes = (obs_dim,) + tuple(hidden_sizes) + (act_dim,)
    key, k1, k2, k3, k4 = jax.random.split(key, 5)
    if with_transforms:
        params = {
            "in_shift": jax.random.normal(k1, (1, obs_dim), jnp.float32),
            "in_scale": jax.random.uniform(k2, (1, obs_dim), jnp.float32, 0.5, 1.5),
            "out_shift": jax.random.normal(k3, (1, act_dim), jnp.float32),
            "out_scale": jax.random.uniform(k4, (1, act_dim), jnp.float32, 0.5, 1.5),
        }
    else:
        # Default transformations (set_transformations with all None).
        params = {
            "in_shift": jnp.zeros((1, obs_dim), jnp.float32),
            "in_scale": jnp.ones((1, obs_dim), jnp.float32),
            "out_shift": jnp.zeros((1, act_dim), jnp.float32),
            "out_scale": jnp.ones((1, act_dim), jnp.float32),
        }
    for li in range(len(layer_sizes) - 1):
        fan_in, fan_out = layer_sizes[li], layer_sizes[li + 1]
        key, kw, kb = jax.random.split(key, 3)
        bound = 1.0 / jnp.sqrt(jnp.float32(fan_in))
        params[f"w{li}"] = jax.random.uniform(
            kw, (fan_in, fan_out), jnp.float32, -bound, bound)
        params[f"b{li}"] = jax.random.uniform(
            kb, (1, fan_out), jnp.float32, -bound, bound)
    return params


def reference_forward(x, params):
    """Pure-JAX reference mirroring the PyTorch forward exactly (unfolded)."""
    out = (x - params["in_shift"]) / (params["in_scale"] + 1e-8)
    out = jax.nn.sigmoid(out @ params["w0"] + params["b0"])
    out = jax.nn.sigmoid(out @ params["w1"] + params["b1"])
    out = out @ params["w2"] + params["b2"]
    return out * params["out_scale"] + params["out_shift"]


if __name__ == "__main__":
    key = jax.random.PRNGKey(0)
    obs_dim, act_dim, hidden = 16, 8, (64, 64)
    batch = 80  # with block_b=32: 3 grid steps incl. a remainder tile

    kp, kx = jax.random.split(key)
    params = init_params(kp, obs_dim, act_dim, hidden, with_transforms=True)
    x = jax.random.normal(kx, (batch, obs_dim), jnp.float32)

    folded = fold_params(params)               # one-time host-side transform
    y = fc_network_forward(x, folded, block_b=32)
    y = jax.block_until_ready(y)

    y_ref = reference_forward(x, params)
    assert y.shape == (batch, act_dim)
    assert jnp.allclose(y, y_ref, atol=1e-4, rtol=1e-4), "mismatch vs reference"

    print("KERNEL_OK")
</pallas_src>

<mosaic_0001>
module attributes {stable_mosaic.version = 11 : i64} {
  func.func @fc_network_kernel(%arg0: i32, %arg1: memref<32x16xf32, #tpu.memory_space<vmem>>, %arg2: memref<16x64xf32, #tpu.memory_space<vmem>>, %arg3: memref<1x64xf32, #tpu.memory_space<vmem>>, %arg4: memref<64x64xf32, #tpu.memory_space<vmem>>, %arg5: memref<1x64xf32, #tpu.memory_space<vmem>>, %arg6: memref<64x8xf32, #tpu.memory_space<vmem>>, %arg7: memref<1x8xf32, #tpu.memory_space<vmem>>, %arg8: memref<32x8xf32, #tpu.memory_space<vmem>>) attributes {dimension_semantics = [#tpu.dimension_semantics<parallel>], iteration_bounds = array<i64: 3>, scalar_prefetch = 0 : i64, scratch_operands = 0 : i64, tpu.core_type = #tpu.core_type<tc>, window_params = [{transform_indices = @transform_0, window_bounds = array<i64: 32, 16>}, {pipeline_mode = #tpu.pipeline_mode<synchronous>, transform_indices = @transform_1, window_bounds = array<i64: 16, 64>}, {pipeline_mode = #tpu.pipeline_mode<synchronous>, transform_indices = @transform_2, window_bounds = array<i64: 1, 64>}, {pipeline_mode = #tpu.pipeline_mode<synchronous>, transform_indices = @transform_3, window_bounds = array<i64: 64, 64>}, {pipeline_mode = #tpu.pipeline_mode<synchronous>, transform_indices = @transform_4, window_bounds = array<i64: 1, 64>}, {pipeline_mode = #tpu.pipeline_mode<synchronous>, transform_indices = @transform_5, window_bounds = array<i64: 64, 8>}, {pipeline_mode = #tpu.pipeline_mode<synchronous>, transform_indices = @transform_6, window_bounds = array<i64: 1, 8>}, {transform_indices = @transform_7, window_bounds = array<i64: 32, 8>}]} {
    %c0 = arith.constant 0 : index
    %c0_0 = arith.constant 0 : index
    %0 = vector.load %arg1[%c0, %c0_0] : memref<32x16xf32, #tpu.memory_space<vmem>>, vector<32x16xf32>
    %c0_1 = arith.constant 0 : index
    %c0_2 = arith.constant 0 : index
    %1 = vector.load %arg2[%c0_1, %c0_2] : memref<16x64xf32, #tpu.memory_space<vmem>>, vector<16x64xf32>
    %cst = arith.constant dense<0.000000e+00> : vector<32x64xf32>
    %2 = tpu.matmul %0, %1, %cst {dimension_numbers = #tpu.dot_dimension_numbers<[1], [0], [0], [1], [0, 0, 1, 1], [], []>} : vector<32x16xf32>, vector<16x64xf32>, vector<32x64xf32> -> vector<32x64xf32>
    %c0_3 = arith.constant 0 : index
    %c0_4 = arith.constant 0 : index
    %3 = vector.load %arg3[%c0_3, %c0_4] : memref<1x64xf32, #tpu.memory_space<vmem>>, vector<1x64xf32>
    %4 = vector.broadcast %3 : vector<1x64xf32> to vector<32x64xf32>
    %5 = arith.addf %2, %4 : vector<32x64xf32>
    %cst_5 = arith.constant 5.000000e-01 : f32
    %6 = vector.broadcast %cst_5 : f32 to vector<32x64xf32>
    %7 = arith.mulf %6, %5 : vector<32x64xf32>
    %8 = math.tanh %7 : vector<32x64xf32>
    %cst_6 = arith.constant 1.000000e+00 : f32
    %9 = vector.broadcast %cst_6 : f32 to vector<32x64xf32>
    %10 = arith.addf %8, %9 : vector<32x64xf32>
    %cst_7 = arith.constant 5.000000e-01 : f32
    %11 = vector.broadcast %cst_7 : f32 to vector<32x64xf32>
    %12 = arith.mulf %11, %10 : vector<32x64xf32>
    %c0_8 = arith.constant 0 : index
    %c0_9 = arith.constant 0 : index
    %13 = vector.load %arg4[%c0_8, %c0_9] : memref<64x64xf32, #tpu.memory_space<vmem>>, vector<64x64xf32>
    %cst_10 = arith.constant dense<0.000000e+00> : vector<32x64xf32>
    %14 = tpu.matmul %12, %13, %cst_10 {dimension_numbers = #tpu.dot_dimension_numbers<[1], [0], [0], [1], [0, 0, 1, 1], [], []>} : vector<32x64xf32>, vector<64x64xf32>, vector<32x64xf32> -> vector<32x64xf32>
    %c0_11 = arith.constant 0 : index
    %c0_12 = arith.constant 0 : index
    %15 = vector.load %arg5[%c0_11, %c0_12] : memref<1x64xf32, #tpu.memory_space<vmem>>, vector<1x64xf32>
    %16 = vector.broadcast %15 : vector<1x64xf32> to vector<32x64xf32>
    %17 = arith.addf %14, %16 : vector<32x64xf32>
    %cst_13 = arith.constant 5.000000e-01 : f32
    %18 = vector.broadcast %cst_13 : f32 to vector<32x64xf32>
    %19 = arith.mulf %18, %17 : vector<32x64xf32>
    %20 = math.tanh %19 : vector<32x64xf32>
    %cst_14 = arith.constant 1.000000e+00 : f32
    %21 = vector.broadcast %cst_14 : f32 to vector<32x64xf32>
    %22 = arith.addf %20, %21 : vector<32x64xf32>
    %cst_15 = arith.constant 5.000000e-01 : f32
    %23 = vector.broadcast %cst_15 : f32 to vector<32x64xf32>
    %24 = arith.mulf %23, %22 : vector<32x64xf32>
    %c0_16 = arith.constant 0 : index
    %c0_17 = arith.constant 0 : index
    %25 = vector.load %arg6[%c0_16, %c0_17] : memref<64x8xf32, #tpu.memory_space<vmem>>, vector<64x8xf32>
    %cst_18 = arith.constant dense<0.000000e+00> : vector<32x8xf32>
    %26 = tpu.matmul %24, %25, %cst_18 {dimension_numbers = #tpu.dot_dimension_numbers<[1], [0], [0], [1], [0, 0, 1, 1], [], []>} : vector<32x64xf32>, vector<64x8xf32>, vector<32x8xf32> -> vector<32x8xf32>
    %c0_19 = arith.constant 0 : index
    %c0_20 = arith.constant 0 : index
    %27 = vector.load %arg7[%c0_19, %c0_20] : memref<1x8xf32, #tpu.memory_space<vmem>>, vector<1x8xf32>
    %28 = vector.broadcast %27 : vector<1x8xf32> to vector<32x8xf32>
    %29 = arith.addf %26, %28 : vector<32x8xf32>
    %c0_21 = arith.constant 0 : index
    %c0_22 = arith.constant 0 : index
    %30 = vector.load %arg8[%c0_21, %c0_22] : memref<32x8xf32, #tpu.memory_space<vmem>>, vector<32x8xf32>
    tpu.vector_store %arg8[%c0_21, %c0_22], %29 {strides = array<i32>} : memref<32x8xf32, #tpu.memory_space<vmem>>, vector<32x8xf32>,
    return
  }
  func.func @transform_0(%arg0: i32) -> (i32, i32) {
    %c0_i32 = arith.constant 0 : i32
    %c0_i32_0 = arith.constant 0 : i32
    return %arg0, %c0_i32 : i32, i32
  }
  func.func @transform_1(%arg0: i32) -> (i32, i32) {
    %c0_i32 = arith.constant 0 : i32
    %c0_i32_0 = arith.constant 0 : i32
    %c0_i32_1 = arith.constant 0 : i32
    return %c0_i32, %c0_i32_0 : i32, i32
  }
  func.func @transform_2(%arg0: i32) -> (i32, i32) {
    %c0_i32 = arith.constant 0 : i32
    %c0_i32_0 = arith.constant 0 : i32
    %c0_i32_1 = arith.constant 0 : i32
    return %c0_i32, %c0_i32_0 : i32, i32
  }
  func.func @transform_3(%arg0: i32) -> (i32, i32) {
    %c0_i32 = arith.constant 0 : i32
    %c0_i32_0 = arith.constant 0 : i32
    %c0_i32_1 = arith.constant 0 : i32
    return %c0_i32, %c0_i32_0 : i32, i32
  }
  func.func @transform_4(%arg0: i32) -> (i32, i32) {
    %c0_i32 = arith.constant 0 : i32
    %c0_i32_0 = arith.constant 0 : i32
    %c0_i32_1 = arith.constant 0 : i32
    return %c0_i32, %c0_i32_0 : i32, i32
  }
  func.func @transform_5(%arg0: i32) -> (i32, i32) {
    %c0_i32 = arith.constant 0 : i32
    %c0_i32_0 = arith.constant 0 : i32
    %c0_i32_1 = arith.constant 0 : i32
    return %c0_i32, %c0_i32_0 : i32, i32
  }
  func.func @transform_6(%arg0: i32) -> (i32, i32) {
    %c0_i32 = arith.constant 0 : i32
    %c0_i32_0 = arith.constant 0 : i32
    %c0_i32_1 = arith.constant 0 : i32
    return %c0_i32, %c0_i32_0 : i32, i32
  }
  func.func @transform_7(%arg0: i32) -> (i32, i32) {
    %c0_i32 = arith.constant 0 : i32
    %c0_i32_0 = arith.constant 0 : i32
    return %arg0, %c0_i32 : i32, i32
  }
}

</mosaic_0001>

<llo_original>
// kernel: tpu_custom_call.1
$region0: #{tpu_custom_call.1}
  #allocation0 [shape = 'u32[]', space=smem, size = 0x4, offset = 0x4, fixed_abs, tag = 'smem constant byte address 0x4 - core index']
  #allocation1 [shape = 'u32[144,128]{1,0:T(1,128)}', space=vmem, size = 0x12000, scoped, tag = 'internal scratch']
  %s0 = inlined_call_operand.vmem [shape: f32[80,16], index: 0, kind: input, shape index: {}]
  %s1 = inlined_call_operand.vmem [shape: f32[16,64], index: 1, kind: input, shape index: {}]
  %s2 = inlined_call_operand.vmem [shape: f32[1,64], index: 2, kind: input, shape index: {}]
  %s3 = inlined_call_operand.vmem [shape: f32[64,64], index: 3, kind: input, shape index: {}]
  %s4 = inlined_call_operand.vmem [shape: f32[1,64], index: 4, kind: input, shape index: {}]
  %s5 = inlined_call_operand.vmem [shape: f32[64,8], index: 5, kind: input, shape index: {}]
  %s6 = inlined_call_operand.vmem [shape: f32[1,8], index: 6, kind: input, shape index: {}]
  %s7 = inlined_call_operand.vmem [shape: f32[80,8], index: 7, kind: output, shape index: {}]
  %s8 = sld [smem:[#allocation0]]
  $region109: #{tpu_custom_call.1} parent=0
    _
  %s10 = ssub.s32 1, %s8
  %s11 = scalar_select 0, %s10, %s8
  $region1: #{tpu_custom_call.1} parent=0
    #allocation2 [shape = 'u8[32768]{0}', space=vmem, size = 0x8000, scoped, tag = 'output window, operand 0']
    loop: start=0, step=1, limit=5
    $region2: #{tpu_custom_call.1} parent=1 // loop_pre_header
      _
    $region3: #{tpu_custom_call.1} parent=1 // loop_header
      %s13 = sphi 0, %s17
      %p14 = scmp.ge.s32.totalorder %s13, 5
      %s23 = sphi 0, %s25
      %s26 = sphi 0, %s23
      %s27 = sphi 0, %s26
      %s43 = sphi 0, %s27
      %s47 = sphi 0, %s47
      %s49 = sphi 0, %s47
      %s50 = sphi 0, %s49
      %s64 = sphi 0, %s50
      %s68 = sphi 0, %s68
      %s70 = sphi 0, %s68
      %s71 = sphi 0, %s70
      %s85 = sphi 0, %s71
      %s89 = sphi 0, %s89
      %s91 = sphi 0, %s89
      %s92 = sphi 0, %s91
      %s106 = sphi 0, %s92
      %s110 = sphi 0, %s110
      %s112 = sphi 0, %s110
      %s113 = sphi 0, %s112
      %s127 = sphi 0, %s113
      %s131 = sphi 0, %s131
      %s133 = sphi 0, %s131
      %s134 = sphi 0, %s133
      %s148 = sphi 0, %s134
      %s152 = sphi 0, %s152
      %s154 = sphi 0, %s152
      %s155 = sphi 0, %s154
      %s169 = sphi 0, %s155
      %s175 = sphi 0, %s177
      %s178 = sphi 0, %s175
      %s179 = sphi 0, %s178
      %s195 = sphi 0, %s179
    $region4: #{tpu_custom_call.1} parent=1 // loop_header_branch
      %16 = sbr.rel (%p14) target = $region8
    $region5: #{tpu_custom_call.1} parent=1 // loop_body
      %s18 = ssub.s32 %s13, 1
      %s19 = ssub.s32 %s13, 2
      %s20 = sadd.s32 %s13, 1
      %s21 = ssub.s32 %s13, %s20
      %p22 = scmp.eq.s32.totalorder %s21, 0
      %s24 = sadd.s32 %s23, 1
      %s25 = scalar_select %p22, %s23, %s24
      %p28 = pneg %p22
      %p29 = scmp.eq.s32.totalorder %s13, 2
      %p30 = por %p28, %p29
      %p31 = scmp.ne.s32.totalorder %s23, %s26
      %p32 = scmp.eq.s32.totalorder %s13, 0
      %p33 = por %p31, %p32
      %p34 = scmp.ne.s32.totalorder %s23, %s26
      %p35 = scmp.eq.s32.totalorder %s18, 2
      %p36 = por %p34, %p35
      %p37 = scmp.ne.s32.totalorder %s26, %s27
      %p38 = scmp.eq.s32.totalorder %s18, 0
      %p39 = por %p37, %p38
      %p40 = scmp.ne.s32.totalorder %s26, %s27
      %p41 = scmp.eq.s32.totalorder %s19, 2
      %p42 = por %p40, %p41
      %p44 = scmp.ne.s32.totalorder %s27, %s43
      %p45 = scmp.eq.s32.totalorder %s19, 0
      %p46 = por %p44, %p45
      %s48 = sadd.s32 %s47, 1
      %p51 = scmp.eq.s32.totalorder %s13, 2
      %p52 = scmp.ne.s32.totalorder %s47, %s49
      %p53 = scmp.eq.s32.totalorder %s13, 0
      %p54 = por %p52, %p53
      %p55 = scmp.ne.s32.totalorder %s47, %s49
      %p56 = scmp.eq.s32.totalorder %s18, 2
      %p57 = por %p55, %p56
      %p58 = scmp.ne.s32.totalorder %s49, %s50
      %p59 = scmp.eq.s32.totalorder %s18, 0
      %p60 = por %p58, %p59
      %p61 = scmp.ne.s32.totalorder %s49, %s50
      %p62 = scmp.eq.s32.totalorder %s19, 2
      %p63 = por %p61, %p62
      %p65 = scmp.ne.s32.totalorder %s50, %s64
      %p66 = scmp.eq.s32.totalorder %s19, 0
      %p67 = por %p65, %p66
      %s69 = sadd.s32 %s68, 1
      %p72 = scmp.eq.s32.totalorder %s13, 2
      %p73 = scmp.ne.s32.totalorder %s68, %s70
      %p74 = scmp.eq.s32.totalorder %s13, 0
      %p75 = por %p73, %p74
      %p76 = scmp.ne.s32.totalorder %s68, %s70
      %p77 = scmp.eq.s32.totalorder %s18, 2
      %p78 = por %p76, %p77
      %p79 = scmp.ne.s32.totalorder %s70, %s71
      %p80 = scmp.eq.s32.totalorder %s18, 0
      %p81 = por %p79, %p80
      %p82 = scmp.ne.s32.totalorder %s70, %s71
      %p83 = scmp.eq.s32.totalorder %s19, 2
      %p84 = por %p82, %p83
      %p86 = scmp.ne.s32.totalorder %s71, %s85
      %p87 = scmp.eq.s32.totalorder %s19, 0
      %p88 = por %p86, %p87
      %s90 = sadd.s32 %s89, 1
      %p93 = scmp.eq.s32.totalorder %s13, 2
      %p94 = scmp.ne.s32.totalorder %s89, %s91
      %p95 = scmp.eq.s32.totalorder %s13, 0
      %p96 = por %p94, %p95
      %p97 = scmp.ne.s32.totalorder %s89, %s91
      %p98 = scmp.eq.s32.totalorder %s18, 2
      %p99 = por %p97, %p98
      %p100 = scmp.ne.s32.totalorder %s91, %s92
      %p101 = scmp.eq.s32.totalorder %s18, 0
      %p102 = por %p100, %p101
      %p103 = scmp.ne.s32.totalorder %s91, %s92
      %p104 = scmp.eq.s32.totalorder %s19, 2
      %p105 = por %p103, %p104
      %p107 = scmp.ne.s32.totalorder %s92, %s106
      %p108 = scmp.eq.s32.totalorder %s19, 0
      %p109 = por %p107, %p108
      %s111 = sadd.s32 %s110, 1
      %p114 = scmp.eq.s32.totalorder %s13, 2
      %p115 = scmp.ne.s32.totalorder %s110, %s112
      %p116 = scmp.eq.s32.totalorder %s13, 0
      %p117 = por %p115, %p116
      %p118 = scmp.ne.s32.totalorder %s110, %s112
      %p119 = scmp.eq.s32.totalorder %s18, 2
      %p120 = por %p118, %p119
      %p121 = scmp.ne.s32.totalorder %s112, %s113
      %p122 = scmp.eq.s32.totalorder %s18, 0
      %p123 = por %p121, %p122
      %p124 = scmp.ne.s32.totalorder %s112, %s113
      %p125 = scmp.eq.s32.totalorder %s19, 2
      %p126 = por %p124, %p125
      %p128 = scmp.ne.s32.totalorder %s113, %s127
      %p129 = scmp.eq.s32.totalorder %s19, 0
      %p130 = por %p128, %p129
      %s132 = sadd.s32 %s131, 1
      %p135 = scmp.eq.s32.totalorder %s13, 2
      %p136 = scmp.ne.s32.totalorder %s131, %s133
      %p137 = scmp.eq.s32.totalorder %s13, 0
      %p138 = por %p136, %p137
      %p139 = scmp.ne.s32.totalorder %s131, %s133
      %p140 = scmp.eq.s32.totalorder %s18, 2
      %p141 = por %p139, %p140
      %p142 = scmp.ne.s32.totalorder %s133, %s134
      %p143 = scmp.eq.s32.totalorder %s18, 0
      %p144 = por %p142, %p143
      %p145 = scmp.ne.s32.totalorder %s133, %s134
      %p146 = scmp.eq.s32.totalorder %s19, 2
      %p147 = por %p145, %p146
      %p149 = scmp.ne.s32.totalorder %s134, %s148
      %p150 = scmp.eq.s32.totalorder %s19, 0
      %p151 = por %p149, %p150
      %s153 = sadd.s32 %s152, 1
      %p156 = scmp.eq.s32.totalorder %s13, 2
      %p157 = scmp.ne.s32.totalorder %s152, %s154
      %p158 = scmp.eq.s32.totalorder %s13, 0
      %p159 = por %p157, %p158
      %p160 = scmp.ne.s32.totalorder %s152, %s154
      %p161 = scmp.eq.s32.totalorder %s18, 2
      %p162 = por %p160, %p161
      %p163 = scmp.ne.s32.totalorder %s154, %s155
      %p164 = scmp.eq.s32.totalorder %s18, 0
      %p165 = por %p163, %p164
      %p166 = scmp.ne.s32.totalorder %s154, %s155
      %p167 = scmp.eq.s32.totalorder %s19, 2
      %p168 = por %p166, %p167
      %p170 = scmp.ne.s32.totalorder %s155, %s169
      %p171 = scmp.eq.s32.totalorder %s19, 0
      %p172 = por %p170, %p171
      %s173 = ssub.s32 %s13, %s20
      %p174 = scmp.eq.s32.totalorder %s173, 0
      %s176 = sadd.s32 %s175, 1
      %s177 = scalar_select %p174, %s175, %s176
      %p180 = pneg %p174
      %p181 = scmp.eq.s32.totalorder %s13, 2
      %p182 = por %p180, %p181
      %p183 = scmp.ne.s32.totalorder %s175, %s178
      %p184 = scmp.eq.s32.totalorder %s13, 0
      %p185 = por %p183, %p184
      %p186 = scmp.ne.s32.totalorder %s175, %s178
      %p187 = scmp.eq.s32.totalorder %s18, 2
      %p188 = por %p186, %p187
      %p189 = scmp.ne.s32.totalorder %s178, %s179
      %p190 = scmp.eq.s32.totalorder %s18, 0
      %p191 = por %p189, %p190
      %p192 = scmp.ne.s32.totalorder %s178, %s179
      %p193 = scmp.eq.s32.totalorder %s19, 2
      %p194 = por %p192, %p193
      %p196 = scmp.ne.s32.totalorder %s179, %s195
      %p197 = scmp.eq.s32.totalorder %s19, 0
      %p198 = por %p196, %p197
      %p199 = scmp.le.s32.totalorder 1, %s13
      %p200 = scmp.lt.s32.totalorder %s13, 4
      %p201 = pnand %p199, %p200
      %p202 = pneg %p201
      // Predicated region
      $region9: #{tpu_custom_call.1} parent=5 // pred_check
        _
      $region10: #{tpu_custom_call.1} parent=5 // pred_check_branch
        %204 = sbr.rel (%p201) target = $region12
      $region11: #{tpu_custom_call.1} parent=5 // pred_region
        %s205 = ssub.s32 %s13, 1
        // Predicated region
        $region13: #{tpu_custom_call.1} parent=11 // pred_check
          %p206 = pneg %p60
        $region14: #{tpu_custom_call.1} parent=11 // pred_check_branch
          %208 = sbr.rel (%p206) target = $region16
        $region15: #{tpu_custom_call.1} parent=11 // pred_region
          _
        $region16: #{tpu_custom_call.1} parent=11 // pred_fallthru
          _
        // Predicated region
        $region17: #{tpu_custom_call.1} parent=11 // pred_check
          %p209 = pneg %p81
        $region18: #{tpu_custom_call.1} parent=11 // pred_check_branch
          %211 = sbr.rel (%p209) target = $region20
        $region19: #{tpu_custom_call.1} parent=11 // pred_region
          _
        $region20: #{tpu_custom_call.1} parent=11 // pred_fallthru
          _
        // Predicated region
        $region21: #{tpu_custom_call.1} parent=11 // pred_check
          %p212 = pneg %p102
        $region22: #{tpu_custom_call.1} parent=11 // pred_check_branch
          %214 = sbr.rel (%p212) target = $region24
        $region23: #{tpu_custom_call.1} parent=11 // pred_region
          _
        $region24: #{tpu_custom_call.1} parent=11 // pred_fallthru
          _
        // Predicated region
        $region25: #{tpu_custom_call.1} parent=11 // pred_check
          %p215 = pneg %p123
        $region26: #{tpu_custom_call.1} parent=11 // pred_check_branch
          %217 = sbr.rel (%p215) target = $region28
        $region27: #{tpu_custom_call.1} parent=11 // pred_region
          _
        $region28: #{tpu_custom_call.1} parent=11 // pred_fallthru
          _
        // Predicated region
        $region29: #{tpu_custom_call.1} parent=11 // pred_check
          %p218 = pneg %p144
        $region30: #{tpu_custom_call.1} parent=11 // pred_check_branch
          %220 = sbr.rel (%p218) target = $region32
        $region31: #{tpu_custom_call.1} parent=11 // pred_region
          _
        $region32: #{tpu_custom_call.1} parent=11 // pred_fallthru
          _
        // Predicated region
        $region33: #{tpu_custom_call.1} parent=11 // pred_check
          %p221 = pneg %p165
        $region34: #{tpu_custom_call.1} parent=11 // pred_check_branch
          %223 = sbr.rel (%p221) target = $region36
        $region35: #{tpu_custom_call.1} parent=11 // pred_region
          _
        $region36: #{tpu_custom_call.1} parent=11 // pred_fallthru
          _
      $region12: #{tpu_custom_call.1} parent=5 // pred_fallthru
        _
      %p224 = scmp.lt.s32.totalorder %s13, 3
      // Predicated region
      $region37: #{tpu_custom_call.1} parent=5 // pred_check
        %p225 = pneg %p224
      $region38: #{tpu_custom_call.1} parent=5 // pred_check_branch
        %227 = sbr.rel (%p225) target = $region40
      $region39: #{tpu_custom_call.1} parent=5 // pred_region
        // Predicated region
        $region41: #{tpu_custom_call.1} parent=39 // pred_check
          %p228 = pneg %p33
        $region42: #{tpu_custom_call.1} parent=39 // pred_check_branch
          %230 = sbr.rel (%p228) target = $region44
        $region43: #{tpu_custom_call.1} parent=39 // pred_region
          %s231 = smul.u32 4, %s13
          %s232 = ssub.s32 10, %s231
          %p233 = scmp.lt.s32.totalorder %s232, 4
          %s234 = scalar_select %p233, %s232, 4
          %s235 = smul.u32 128, %s234
          %p236 = scmp.lt.s32.totalorder %s231, 9
          %s237 = scalar_select %p236, %s231, 9
          %s238 = smul.addr %s237, 8
          %s239 = scalar_lea.vmem %s0, %s238
          %s240 = smul.u32 4, %s13
          %s241 = ssub.s32 10, %s240
          %p242 = scmp.lt.s32.totalorder %s241, 4
          %s243 = scalar_select %p242, %s241, 4
          %s244 = smul.u32 128, %s243
        $region44: #{tpu_custom_call.1} parent=39 // pred_fallthru
          _
      $region40: #{tpu_custom_call.1} parent=5 // pred_fallthru
        _
      %p245 = scmp.le.s32.totalorder 1, %s13
      %p246 = scmp.lt.s32.totalorder %s13, 4
      %p247 = pnand %p245, %p246
      %p248 = pneg %p247
      // Predicated region
      $region45: #{tpu_custom_call.1} parent=5 // pred_check
        _
      $region46: #{tpu_custom_call.1} parent=5 // pred_check_branch
        %250 = sbr.rel (%p247) target = $region48
      $region47: #{tpu_custom_call.1} parent=5 // pred_region
        %s251 = ssub.s32 %s13, 1
        %s252 = smul.u32 4, %s18
        %s253 = ssub.s32 10, %s252
        %p254 = scmp.lt.s32.totalorder %s253, 4
        %s255 = scalar_select %p254, %s253, 4
        %s256 = smul.u32 128, %s255
        %p257 = scmp.lt.s32.totalorder %s252, 9
        %s258 = scalar_select %p257, %s252, 9
        %s259 = smul.addr %s258, 8
        %s260 = scalar_lea.vmem %s0, %s259
        %p261 = pneg %p39
        %p262 = pneg %p36
        %p263 = pneg %p60
        %p264 = pneg %p57
        %p265 = pneg %p81
        %p266 = pneg %p78
        %p267 = pneg %p102
        %p268 = pneg %p99
        %p269 = pneg %p123
        %p270 = pneg %p120
        %p271 = pneg %p144
        %p272 = pneg %p141
        %p273 = pneg %p165
        %p274 = pneg %p162
        %p275 = pneg %p191
        %p276 = pneg %p188
        %s277 = sand.u32 %s178, 1
        %s278 = sand.u32 %s178, 1
        %s279 = smul.addr %s278, 32
        %s280 = scalar_lea.vmem [#allocation2], %s279
        %s281 = smul.u32 4, %s18
        %s282 = ssub.s32 10, %s281
        %p283 = scmp.lt.s32.totalorder %s282, 4
        %s284 = scalar_select %p283, %s282, 4
        %s285 = smul.u32 128, %s284
        %p286 = scmp.lt.s32.totalorder %s281, 9
        %s287 = scalar_select %p286, %s281, 9
        %s288 = smul.addr %s287, 8
        %s289 = scalar_lea.vmem %s0, %s288
        %s290 = smul.u32 4, %s18
        %s291 = ssub.s32 10, %s290
        %p292 = scmp.lt.s32.totalorder %s291, 4
        %s293 = scalar_select %p292, %s291, 4
        %s294 = smul.u32 128, %s293
        %s295 = smul.u32 4, %s18
        %s296 = ssub.s32 10, %s295
        %p297 = scmp.lt.s32.totalorder %s296, 4
        %s298 = scalar_select %p297, %s296, 4
        %s299 = smul.u32 128, %s298
        %v300 = vld [vmem:[%s289] sm:$0xff]
        %v301 = vld [vmem:[%s289 + $0x8] sm:$0xff]
        %v302 = vld [vmem:[%s289 + $0x10] sm:$0xff]
        %v303 = vld [vmem:[%s289 + $0x18] sm:$0xff]
        %v304 = vld [vmem:[%s1] sm:$0xff]
        %v305 = vld [vmem:[%s1 + $0x8] sm:$0xff]
        %v306 = vld [vmem:[%s2] sm:$0x1]
        %v308 = vlaneseq
        %v309 = vshrl.u32 %v308, 7
        %v310 = vsub.s32 0, %v309
        %v311 = vrot.slane %v306, %v310
        %vm313 = vcmask 130048
        %v315 = vsel %vm313, %v300, 0
        %v318 = vsel %vm313, %v301, 0
        %v321 = vsel %vm313, %v302, 0
        %v324 = vsel %vm313, %v303, 0
        %326 = vmatprep.subr.mxu0 0.0
        %327 = vmatpush1.msra.mxu0 %v304
        %328 = vmatprep.subr.mxu0 0.0
        %329 = vmatpush1.msra.mxu0 %v305
        %330 = vmatprep.subr.mxu0 0.0
        %331 = vmatpush1.msra.mxu0 0.0
        %332 = vmatprep.subr.mxu0 0.0
        %333 = vmatpush1.msra.mxu0 0.0
        %334 = vmatprep.subr.mxu0 0.0
        %335 = vmatpush1.msra.mxu0 0.0
        %336 = vmatprep.subr.mxu0 0.0
        %337 = vmatpush1.msra.mxu0 0.0
        %338 = vmatprep.subr.mxu0 0.0
        %339 = vmatpush1.msra.mxu0 0.0
        %340 = vmatprep.subr.mxu0 0.0
        %341 = vmatpush1.msra.mxu0 0.0
        %342 = vmatprep.subr.mxu0 0.0
        %343 = vmatpush1.msra.mxu0 0.0
        %344 = vmatprep.subr.mxu0 0.0
        %345 = vmatpush1.msra.mxu0 0.0
        %346 = vmatprep.subr.mxu0 0.0
        %347 = vmatpush1.msra.mxu0 0.0
        %348 = vmatprep.subr.mxu0 0.0
        %349 = vmatpush1.msra.mxu0 0.0
        %350 = vmatprep.subr.mxu0 0.0
        %351 = vmatpush1.msra.mxu0 0.0
        %352 = vmatprep.subr.mxu0 0.0
        %353 = vmatpush1.msra.mxu0 0.0
        %354 = vmatprep.subr.mxu0 0.0
        %355 = vmatpush1.msra.mxu0 0.0
        %356 = vmatprep.subr.mxu0 0.0
        %357 = vmatpush1.msra.mxu0 0.0
        %358 = vmatprep.subr.mxu0 0.0
        %359 = vmatpush1.msra.mxu0 0.0
        %360 = vmatprep.subr.mxu0 0.0
        %361 = vmatpush1.msra.mxu0 0.0
        %362 = vmatprep.subr.mxu0 0.0
        %363 = vmatpush1.msra.mxu0 0.0
        %364 = vmatprep.subr.mxu0 0.0
        %365 = vmatpush1.msra.mxu0 0.0
        %366 = vmatprep.subr.mxu0 0.0
        %367 = vmatpush1.msra.mxu0 0.0
        %368 = vmatprep.subr.mxu0 0.0
        %369 = vmatpush1.msra.mxu0 0.0
        %370 = vmatprep.subr.mxu0 0.0
        %371 = vmatpush1.msra.mxu0 0.0
        %372 = vmatprep.subr.mxu0 0.0
        %373 = vmatpush1.msra.mxu0 0.0
        %374 = vmatprep.subr.mxu0 0.0
        %375 = vmatpush1.msra.mxu0 0.0
        %376 = vmatprep.subr.mxu0 0.0
        %377 = vmatpush1.msra.mxu0 0.0
        %378 = vmatprep.subr.mxu0 0.0
        %379 = vmatpush1.msra.mxu0 0.0
        %380 = vmatprep.subr.mxu0 0.0
        %381 = vmatpush1.msra.mxu0 0.0
        %382 = vmatprep.subr.mxu0 0.0
        %383 = vmatpush1.msra.mxu0 0.0
        %384 = vmatprep.subr.mxu0 0.0
        %385 = vmatpush1.msra.mxu0 0.0
        %386 = vmatprep.subr.mxu0 0.0
        %387 = vmatpush1.msra.mxu0 0.0
        %388 = vmatprep.subr.mxu0 0.0
        %389 = vmatpush1.msra.mxu0 0.0
        %390 = vmatprep.mubr.f32.mxu0 0.0
        %391 = vmatmul.mubr.f32.gmra.mrb[0].mxu0 %v315
        %v392 = vpop.f32.mrb[0].mxu0
        %v393 = vadd.f32 %v311, %v392
        %v394 = vpop.f32.mrb[0].mxu0
        %395 = vmatprep.mubr.f32.mxu0 0.0
        %396 = vmatmul.mubr.f32.gmra.mrb[0].mxu0 %v318
        %v397 = vpop.f32.mrb[0].mxu0
        %v398 = vadd.f32 %v311, %v397
        %v399 = vpop.f32.mrb[0].mxu0
        %400 = vmatprep.mubr.f32.mxu0 0.0
        %401 = vmatmul.mubr.f32.gmra.mrb[0].mxu0 %v321
        %v402 = vpop.f32.mrb[0].mxu0
        %v403 = vadd.f32 %v311, %v402
        %v404 = vpop.f32.mrb[0].mxu0
        %405 = vmatprep.mubr.f32.mxu0 0.0
        %406 = vmatmul.mubr.f32.gmra.mrb[0].mxu0 %v324
        %v407 = vpop.f32.mrb[0].mxu0
        %v408 = vadd.f32 %v311, %v407
        %v409 = vpop.f32.mrb[0].mxu0
        %410 = vdwg.mxu0
        %v411 = vmul.f32 %v393, 0.5
        %v412 = vmul.f32 %v398, 0.5
        %v413 = vmul.f32 %v403, 0.5
        %v414 = vmul.f32 %v408, 0.5
        %v415 = vtanh.pop %v411
        %v416 = vtanh.pop %v412
        %v417 = vtanh.pop %v413
        %v418 = vtanh.pop %v414
        %v419 = vadd.f32 %v415, 1.0
        %v420 = vadd.f32 %v416, 1.0
        %v421 = vadd.f32 %v417, 1.0
        %v422 = vadd.f32 %v418, 1.0
        %v423 = vmul.f32 %v419, 0.5
        %v424 = vmul.f32 %v420, 0.5
        %v425 = vmul.f32 %v421, 0.5
        %v426 = vmul.f32 %v422, 0.5
        %v427 = vld [vmem:[%s3] sm:$0xff]
        %v428 = vld [vmem:[%s3 + $0x8] sm:$0xff]
        %v429 = vld [vmem:[%s3 + $0x10] sm:$0xff]
        %v430 = vld [vmem:[%s3 + $0x18] sm:$0xff]
        %v431 = vld [vmem:[%s3 + $0x20] sm:$0xff]
        %v432 = vld [vmem:[%s3 + $0x28] sm:$0xff]
        %v433 = vld [vmem:[%s3 + $0x30] sm:$0xff]
        %v434 = vld [vmem:[%s3 + $0x38] sm:$0xff]
        %v435 = vld [vmem:[%s4] sm:$0x1]
        %v437 = vlaneseq
        %v438 = vshrl.u32 %v437, 7
        %v439 = vsub.s32 0, %v438
        %v440 = vrot.slane %v435, %v439
        %vm442 = vcmask 523264
        %v444 = vsel %vm442, %v423, 0
        %v447 = vsel %vm442, %v424, 0
        %v450 = vsel %vm442, %v425, 0
        %v453 = vsel %vm442, %v426, 0
        %455 = vmatprep.subr.mxu0 0.0
        %456 = vmatpush1.msra.mxu0 %v427
        %457 = vmatprep.subr.mxu0 0.0
        %458 = vmatpush1.msra.mxu0 %v428
        %459 = vmatprep.subr.mxu0 0.0
        %460 = vmatpush1.msra.mxu0 %v429
        %461 = vmatprep.subr.mxu0 0.0
        %462 = vmatpush1.msra.mxu0 %v430
        %463 = vmatprep.subr.mxu0 0.0
        %464 = vmatpush1.msra.mxu0 %v431
        %465 = vmatprep.subr.mxu0 0.0
        %466 = vmatpush1.msra.mxu0 %v432
        %467 = vmatprep.subr.mxu0 0.0
        %468 = vmatpush1.msra.mxu0 %v433
        %469 = vmatprep.subr.mxu0 0.0
        %470 = vmatpush1.msra.mxu0 %v434
        %471 = vmatprep.subr.mxu0 0.0
        %472 = vmatpush1.msra.mxu0 0.0
        %473 = vmatprep.subr.mxu0 0.0
        %474 = vmatpush1.msra.mxu0 0.0
        %475 = vmatprep.subr.mxu0 0.0
        %476 = vmatpush1.msra.mxu0 0.0
        %477 = vmatprep.subr.mxu0 0.0
        %478 = vmatpush1.msra.mxu0 0.0
        %479 = vmatprep.subr.mxu0 0.0
        %480 = vmatpush1.msra.mxu0 0.0
        %481 = vmatprep.subr.mxu0 0.0
        %482 = vmatpush1.msra.mxu0 0.0
        %483 = vmatprep.subr.mxu0 0.0
        %484 = vmatpush1.msra.mxu0 0.0
        %485 = vmatprep.subr.mxu0 0.0
        %486 = vmatpush1.msra.mxu0 0.0
        %487 = vmatprep.subr.mxu0 0.0
        %488 = vmatpush1.msra.mxu0 0.0
        %489 = vmatprep.subr.mxu0 0.0
        %490 = vmatpush1.msra.mxu0 0.0
        %491 = vmatprep.subr.mxu0 0.0
        %492 = vmatpush1.msra.mxu0 0.0
        %493 = vmatprep.subr.mxu0 0.0
        %494 = vmatpush1.msra.mxu0 0.0
        %495 = vmatprep.subr.mxu0 0.0
        %496 = vmatpush1.msra.mxu0 0.0
        %497 = vmatprep.subr.mxu0 0.0
        %498 = vmatpush1.msra.mxu0 0.0
        %499 = vmatprep.subr.mxu0 0.0
        %500 = vmatpush1.msra.mxu0 0.0
        %501 = vmatprep.subr.mxu0 0.0
        %502 = vmatpush1.msra.mxu0 0.0
        %503 = vmatprep.subr.mxu0 0.0
        %504 = vmatpush1.msra.mxu0 0.0
        %505 = vmatprep.subr.mxu0 0.0
        %506 = vmatpush1.msra.mxu0 0.0
        %507 = vmatprep.subr.mxu0 0.0
        %508 = vmatpush1.msra.mxu0 0.0
        %509 = vmatprep.subr.mxu0 0.0
        %510 = vmatpush1.msra.mxu0 0.0
        %511 = vmatprep.subr.mxu0 0.0
        %512 = vmatpush1.msra.mxu0 0.0
        %513 = vmatprep.subr.mxu0 0.0
        %514 = vmatpush1.msra.mxu0 0.0
        %515 = vmatprep.subr.mxu0 0.0
        %516 = vmatpush1.msra.mxu0 0.0
        %517 = vmatprep.subr.mxu0 0.0
        %518 = vmatpush1.msra.mxu0 0.0
        %519 = vmatprep.mubr.f32.mxu0 0.0
        %520 = vmatmul.mubr.f32.gmra.mrb[0].mxu0 %v444
        %v521 = vpop.f32.mrb[0].mxu0
        %v522 = vadd.f32 %v440, %v521
        %v523 = vpop.f32.mrb[0].mxu0
        %524 = vmatprep.mubr.f32.mxu0 0.0
        %525 = vmatmul.mubr.f32.gmra.mrb[0].mxu0 %v447
        %v526 = vpop.f32.mrb[0].mxu0
        %v527 = vadd.f32 %v440, %v526
        %v528 = vpop.f32.mrb[0].mxu0
        %529 = vmatprep.mubr.f32.mxu0 0.0
        %530 = vmatmul.mubr.f32.gmra.mrb[0].mxu0 %v450
        %v531 = vpop.f32.mrb[0].mxu0
        %v532 = vadd.f32 %v440, %v531
        %v533 = vpop.f32.mrb[0].mxu0
        %534 = vmatprep.mubr.f32.mxu0 0.0
        %535 = vmatmul.mubr.f32.gmra.mrb[0].mxu0 %v453
        %v536 = vpop.f32.mrb[0].mxu0
        %v537 = vadd.f32 %v440, %v536
        %v538 = vpop.f32.mrb[0].mxu0
        %539 = vdwg.mxu0
        %v540 = vmul.f32 %v522, 0.5
        %v541 = vmul.f32 %v527, 0.5
        %v542 = vmul.f32 %v532, 0.5
        %v543 = vmul.f32 %v537, 0.5
        %v544 = vtanh.pop %v540
        %v545 = vtanh.pop %v541
        %v546 = vtanh.pop %v542
        %v547 = vtanh.pop %v543
        %v548 = vadd.f32 %v544, 1.0
        %v549 = vadd.f32 %v545, 1.0
        %v550 = vadd.f32 %v546, 1.0
        %v551 = vadd.f32 %v547, 1.0
        %v552 = vmul.f32 %v548, 0.5
        %v553 = vmul.f32 %v549, 0.5
        %v554 = vmul.f32 %v550, 0.5
        %v555 = vmul.f32 %v551, 0.5
        %v556 = vld [vmem:[%s5] sm:$0xff]
        %v557 = vld [vmem:[%s5 + $0x8] sm:$0xff]
        %v558 = vld [vmem:[%s5 + $0x10] sm:$0xff]
        %v559 = vld [vmem:[%s5 + $0x18] sm:$0xff]
        %v560 = vld [vmem:[%s5 + $0x20] sm:$0xff]
        %v561 = vld [vmem:[%s5 + $0x28] sm:$0xff]
        %v562 = vld [vmem:[%s5 + $0x30] sm:$0xff]
        %v563 = vld [vmem:[%s5 + $0x38] sm:$0xff]
        %v564 = vld [vmem:[%s6] sm:$0x1]
        %v566 = vlaneseq
        %v567 = vshrl.u32 %v566, 7
        %v568 = vsub.s32 0, %v567
        %v569 = vrot.slane %v564, %v568
        %v572 = vsel %vm442, %v552, 0
        %v575 = vsel %vm442, %v553, 0
        %v578 = vsel %vm442, %v554, 0
        %v581 = vsel %vm442, %v555, 0
        %583 = vmatprep.subr.mxu0 0.0
        %584 = vmatpush1.msra.mxu0 %v556
        %585 = vmatprep.subr.mxu0 0.0
        %586 = vmatpush1.msra.mxu0 %v557
        %587 = vmatprep.subr.mxu0 0.0
        %588 = vmatpush1.msra.mxu0 %v558
        %589 = vmatprep.subr.mxu0 0.0
        %590 = vmatpush1.msra.mxu0 %v559
        %591 = vmatprep.subr.mxu0 0.0
        %592 = vmatpush1.msra.mxu0 %v560
        %593 = vmatprep.subr.mxu0 0.0
        %594 = vmatpush1.msra.mxu0 %v561
        %595 = vmatprep.subr.mxu0 0.0
        %596 = vmatpush1.msra.mxu0 %v562
        %597 = vmatprep.subr.mxu0 0.0
        %598 = vmatpush1.msra.mxu0 %v563
        %599 = vmatprep.subr.mxu0 0.0
        %600 = vmatpush1.msra.mxu0 0.0
        %601 = vmatprep.subr.mxu0 0.0
        %602 = vmatpush1.msra.mxu0 0.0
        %603 = vmatprep.subr.mxu0 0.0
        %604 = vmatpush1.msra.mxu0 0.0
        %605 = vmatprep.subr.mxu0 0.0
        %606 = vmatpush1.msra.mxu0 0.0
        %607 = vmatprep.subr.mxu0 0.0
        %608 = vmatpush1.msra.mxu0 0.0
        %609 = vmatprep.subr.mxu0 0.0
        %610 = vmatpush1.msra.mxu0 0.0
        %611 = vmatprep.subr.mxu0 0.0
        %612 = vmatpush1.msra.mxu0 0.0
        %613 = vmatprep.subr.mxu0 0.0
        %614 = vmatpush1.msra.mxu0 0.0
        %615 = vmatprep.subr.mxu0 0.0
        %616 = vmatpush1.msra.mxu0 0.0
        %617 = vmatprep.subr.mxu0 0.0
        %618 = vmatpush1.msra.mxu0 0.0
        %619 = vmatprep.subr.mxu0 0.0
        %620 = vmatpush1.msra.mxu0 0.0
        %621 = vmatprep.subr.mxu0 0.0
        %622 = vmatpush1.msra.mxu0 0.0
        %623 = vmatprep.subr.mxu0 0.0
        %624 = vmatpush1.msra.mxu0 0.0
        %625 = vmatprep.subr.mxu0 0.0
        %626 = vmatpush1.msra.mxu0 0.0
        %627 = vmatprep.subr.mxu0 0.0
        %628 = vmatpush1.msra.mxu0 0.0
        %629 = vmatprep.subr.mxu0 0.0
        %630 = vmatpush1.msra.mxu0 0.0
        %631 = vmatprep.subr.mxu0 0.0
        %632 = vmatpush1.msra.mxu0 0.0
        %633 = vmatprep.subr.mxu0 0.0
        %634 = vmatpush1.msra.mxu0 0.0
        %635 = vmatprep.subr.mxu0 0.0
        %636 = vmatpush1.msra.mxu0 0.0
        %637 = vmatprep.subr.mxu0 0.0
        %638 = vmatpush1.msra.mxu0 0.0
        %639 = vmatprep.subr.mxu0 0.0
        %640 = vmatpush1.msra.mxu0 0.0
        %641 = vmatprep.subr.mxu0 0.0
        %642 = vmatpush1.msra.mxu0 0.0
        %643 = vmatprep.subr.mxu0 0.0
        %644 = vmatpush1.msra.mxu0 0.0
        %645 = vmatprep.subr.mxu0 0.0
        %646 = vmatpush1.msra.mxu0 0.0
        %647 = vmatprep.mubr.f32.mxu0 0.0
        %648 = vmatmul.mubr.f32.gmra.mrb[0].mxu0 %v572
        %v649 = vpop.f32.mrb[0].mxu0
        %v650 = vadd.f32 %v569, %v649
        %v651 = vpop.f32.mrb[0].mxu0
        %652 = vmatprep.mubr.f32.mxu0 0.0
        %653 = vmatmul.mubr.f32.gmra.mrb[0].mxu0 %v575
        %v654 = vpop.f32.mrb[0].mxu0
        %v655 = vadd.f32 %v569, %v654
        %v656 = vpop.f32.mrb[0].mxu0
        %657 = vmatprep.mubr.f32.mxu0 0.0
        %658 = vmatmul.mubr.f32.gmra.mrb[0].mxu0 %v578
        %v659 = vpop.f32.mrb[0].mxu0
        %v660 = vadd.f32 %v569, %v659
        %v661 = vpop.f32.mrb[0].mxu0
        %662 = vmatprep.mubr.f32.mxu0 0.0
        %663 = vmatmul.mubr.f32.gmra.mrb[0].mxu0 %v581
        %v664 = vpop.f32.mrb[0].mxu0
        %v665 = vadd.f32 %v569, %v664
        %v666 = vpop.f32.mrb[0].mxu0
        %667 = vdwg.mxu0
        %vm668 = vcmask 64512
        %669 = vst.msk [vmem:[%s280] sm:$0xff] %vm668, %v650
        %670 = vst.msk [vmem:[%s280 + $0x8] sm:$0xff] %vm668, %v655
        %671 = vst.msk [vmem:[%s280 + $0x10] sm:$0xff] %vm668, %v660
        %672 = vst.msk [vmem:[%s280 + $0x18] sm:$0xff] %vm668, %v665
        %s673 = sand.u32 %s178, 1
        %s674 = sand.u32 %s178, 1
        %s675 = smul.addr %s674, 32
        %s676 = scalar_lea.vmem [#allocation2], %s675
        // Predicated region
        $region49: #{tpu_custom_call.1} parent=47 // pred_check
          %p677 = pneg %p188
        $region50: #{tpu_custom_call.1} parent=47 // pred_check_branch
          %679 = sbr.rel (%p677) target = $region52
        $region51: #{tpu_custom_call.1} parent=47 // pred_region
          %s680 = smul.u32 4, %s18
          %s681 = ssub.s32 10, %s680
          %p682 = scmp.lt.s32.totalorder %s681, 4
          %s683 = scalar_select %p682, %s681, 4
          %s684 = smul.u32 128, %s683
          %p685 = scmp.ne.s32.totalorder 0, %s684
          %s686 = smul.addr %s680, 8
          %s687 = scalar_lea.vmem %s7, %s686
          // Predicated region
          $region53: #{tpu_custom_call.1} parent=51 // pred_check
            %p688 = pneg %p685
          $region54: #{tpu_custom_call.1} parent=51 // pred_check_branch
            %690 = sbr.rel (%p688) target = $region56
          $region55: #{tpu_custom_call.1} parent=51 // pred_region
            // Predicated region
            $region57: #{tpu_custom_call.1} parent=55 // pred_check
              _
            $region58: #{tpu_custom_call.1} parent=55 // pred_check_branch
              %692 = sbr.rel (0) target = $region60
            $region59: #{tpu_custom_call.1} parent=55 // pred_region
              // Predicated region
              $region79: #{tpu_custom_call.1} parent=59 // pred_check
                _
              $region80: #{tpu_custom_call.1} parent=59 // pred_check_branch
                %747 = sbr.rel (0) target = $region82
              $region81: #{tpu_custom_call.1} parent=59 // pred_region
                %s748 = sshrl.u32 %s683, 2
                // While loop
                $region83: #{tpu_custom_call.1} parent=81 // loop_pre_header
                  _
                $region84: #{tpu_custom_call.1} parent=81 // loop_header
                  %s750 = sphi 0, %s752
                  %p751 = scmp.ge.s32.totalorder %s750, %s748
                  %s755 = sphi 0, %s768
                  %s756 = sphi %s676, %s771
                  %s757 = sphi %s687, %s772
                $region85: #{tpu_custom_call.1} parent=81 // loop_header_branch
                  %754 = sbr.rel (%p751) target = $region89
                $region86: #{tpu_custom_call.1} parent=81 // loop_body
                  %v758 = vld [vmem:[%s756] sm:$0xff]
                  %759 = vst [vmem:[%s757] sm:$0xff] %v758
                  %v760 = vld [vmem:[%s756 + $0x8] sm:$0xff]
                  %761 = vst [vmem:[%s757 + $0x8] sm:$0xff] %v760
                  %v762 = vld [vmem:[%s756 + $0x10] sm:$0xff]
                  %763 = vst [vmem:[%s757 + $0x10] sm:$0xff] %v762
                  %v764 = vld [vmem:[%s756 + $0x18] sm:$0xff]
                  %765 = vst [vmem:[%s757 + $0x18] sm:$0xff] %v764
                  %s766 = sadd.s32 1, %s755
                  %p767 = scmp.ge.s32.totalorder %s766, %s748
                  %s768 = scalar_select %p767, 0, %s766
                  %s769 = smul.u32 %s768, 32
                  %s770 = smul.u32 %s768, 32
                  %s771 = scalar_lea.vmem %s676, %s769 [#allocation2]
                  %s772 = scalar_lea.vmem %s687, %s770
                $region87: #{tpu_custom_call.1} parent=81 // loop_footer
                  %s752 = sadd.s32 %s750, 1
                $region88: #{tpu_custom_call.1} parent=81 // loop_footer_branch
                  %749 = sbr.rel target = $region84
                $region89: #{tpu_custom_call.1} parent=81 // loop_exit
                  _
                %s773 = sshrl.u32 %s683, 2
                %s774 = sand.u32 %s683, 3
                %s775 = smul.u32 %s773, 4
                %s776 = smul.u32 8, %s775
                %s777 = scalar_lea.vmem %s676, %s776 [#allocation2]
                %s778 = smul.u32 8, %s775
                %s779 = scalar_lea.vmem %s687, %s778
                // While loop
                $region90: #{tpu_custom_call.1} parent=81 // loop_pre_header
                  _
                $region91: #{tpu_custom_call.1} parent=81 // loop_header
                  %s781 = sphi 0, %s783
                  %p782 = scmp.ge.s32.totalorder %s781, %s774
                  %s786 = sphi 0, %s793
                  %s787 = sphi %s777, %s796
                  %s788 = sphi %s779, %s797
                $region92: #{tpu_custom_call.1} parent=81 // loop_header_branch
                  %785 = sbr.rel (%p782) target = $region96
                $region93: #{tpu_custom_call.1} parent=81 // loop_body
                  %v789 = vld [vmem:[%s787] sm:$0xff]
                  %790 = vst [vmem:[%s788] sm:$0xff] %v789
                  %s791 = sadd.s32 1, %s786
                  %p792 = scmp.ge.s32.totalorder %s791, %s774
                  %s793 = scalar_select %p792, 0, %s791
                  %s794 = smul.u32 %s793, 8
                  %s795 = smul.u32 %s793, 8
                  %s796 = scalar_lea.vmem %s777, %s794 [#allocation2]
                  %s797 = scalar_lea.vmem %s779, %s795
                $region94: #{tpu_custom_call.1} parent=81 // loop_footer
                  %s783 = sadd.s32 %s781, 1
                $region95: #{tpu_custom_call.1} parent=81 // loop_footer_branch
                  %780 = sbr.rel target = $region91
                $region96: #{tpu_custom_call.1} parent=81 // loop_exit
                  _
              $region82: #{tpu_custom_call.1} parent=59 // pred_fallthru
                _
              // Predicated region
              $region97: #{tpu_custom_call.1} parent=59 // pred_check
                _
              $region98: #{tpu_custom_call.1} parent=59 // pred_check_branch
                %799 = sbr.rel target = $region100
              $region99: #{tpu_custom_call.1} parent=59 // pred_region
                _
              $region100: #{tpu_custom_call.1} parent=59 // pred_fallthru
                _
            $region60: #{tpu_custom_call.1} parent=55 // pred_fallthru
              _
            // Predicated region
            $region61: #{tpu_custom_call.1} parent=55 // pred_check
              _
            $region62: #{tpu_custom_call.1} parent=55 // pred_check_branch
              %694 = sbr.rel target = $region64
            $region63: #{tpu_custom_call.1} parent=55 // pred_region
              %s696 = sshrl.u32 %s683, 2
              // While loop
              $region65: #{tpu_custom_call.1} parent=63 // loop_pre_header
                _
              $region66: #{tpu_custom_call.1} parent=63 // loop_header
                %s698 = sphi 0, %s700
                %p699 = scmp.ge.s32.totalorder %s698, %s696
                %s703 = sphi 0, %s716
                %s704 = sphi %s676, %s719
                %s705 = sphi %s687, %s720
              $region67: #{tpu_custom_call.1} parent=63 // loop_header_branch
                %702 = sbr.rel (%p699) target = $region71
              $region68: #{tpu_custom_call.1} parent=63 // loop_body
                %v706 = vld [vmem:[%s704] sm:$0xff]
                %707 = vst [vmem:[%s705] sm:$0xff] %v706
                %v708 = vld [vmem:[%s704 + $0x8] sm:$0xff]
                %709 = vst [vmem:[%s705 + $0x8] sm:$0xff] %v708
                %v710 = vld [vmem:[%s704 + $0x10] sm:$0xff]
                %711 = vst [vmem:[%s705 + $0x10] sm:$0xff] %v710
                %v712 = vld [vmem:[%s704 + $0x18] sm:$0xff]
                %713 = vst [vmem:[%s705 + $0x18] sm:$0xff] %v712
                %s714 = sadd.s32 1, %s703
                %p715 = scmp.ge.s32.totalorder %s714, %s696
                %s716 = scalar_select %p715, 0, %s714
                %s717 = smul.u32 %s716, 32
                %s718 = smul.u32 %s716, 32
                %s719 = scalar_lea.vmem %s676, %s717 [#allocation2]
                %s720 = scalar_lea.vmem %s687, %s718
              $region69: #{tpu_custom_call.1} parent=63 // loop_footer
                %s700 = sadd.s32 %s698, 1
              $region70: #{tpu_custom_call.1} parent=63 // loop_footer_branch
                %697 = sbr.rel target = $region66
              $region71: #{tpu_custom_call.1} parent=63 // loop_exit
                _
              %s721 = sshrl.u32 %s683, 2
              %s722 = sand.u32 %s683, 3
              %s723 = smul.u32 %s721, 4
              %s724 = smul.u32 8, %s723
              %s725 = scalar_lea.vmem %s676, %s724 [#allocation2]
              %s726 = smul.u32 8, %s723
              %s727 = scalar_lea.vmem %s687, %s726
              // While loop
              $region72: #{tpu_custom_call.1} parent=63 // loop_pre_header
                _
              $region73: #{tpu_custom_call.1} parent=63 // loop_header
                %s729 = sphi 0, %s731
                %p730 = scmp.ge.s32.totalorder %s729, %s722
                %s734 = sphi 0, %s741
                %s735 = sphi %s725, %s744
                %s736 = sphi %s727, %s745
              $region74: #{tpu_custom_call.1} parent=63 // loop_header_branch
                %733 = sbr.rel (%p730) target = $region78
              $region75: #{tpu_custom_call.1} parent=63 // loop_body
                %v737 = vld [vmem:[%s735] sm:$0xff]
                %738 = vst [vmem:[%s736] sm:$0xff] %v737
                %s739 = sadd.s32 1, %s734
                %p740 = scmp.ge.s32.totalorder %s739, %s722
                %s741 = scalar_select %p740, 0, %s739
                %s742 = smul.u32 %s741, 8
                %s743 = smul.u32 %s741, 8
                %s744 = scalar_lea.vmem %s725, %s742 [#allocation2]
                %s745 = scalar_lea.vmem %s727, %s743
              $region76: #{tpu_custom_call.1} parent=63 // loop_footer
                %s731 = sadd.s32 %s729, 1
              $region77: #{tpu_custom_call.1} parent=63 // loop_footer_branch
                %728 = sbr.rel target = $region73
              $region78: #{tpu_custom_call.1} parent=63 // loop_exit
                _
            $region64: #{tpu_custom_call.1} parent=55 // pred_fallthru
              _
          $region56: #{tpu_custom_call.1} parent=51 // pred_fallthru
            _
          %800 = vnop
        $region52: #{tpu_custom_call.1} parent=47 // pred_fallthru
          _
      $region48: #{tpu_custom_call.1} parent=5 // pred_fallthru
        _
      %p801 = scmp.le.s32.totalorder 2, %s13
      // Predicated region
      $region101: #{tpu_custom_call.1} parent=5 // pred_check
        %p802 = pneg %p801
      $region102: #{tpu_custom_call.1} parent=5 // pred_check_branch
        %804 = sbr.rel (%p802) target = $region104
      $region103: #{tpu_custom_call.1} parent=5 // pred_region
        %s805 = ssub.s32 %s13, 2
        // Predicated region
        $region105: #{tpu_custom_call.1} parent=103 // pred_check
          %p806 = pneg %p194
        $region106: #{tpu_custom_call.1} parent=103 // pred_check_branch
          %808 = sbr.rel (%p806) target = $region108
        $region107: #{tpu_custom_call.1} parent=103 // pred_region
          %s809 = sand.u32 %s179, 1
          %s810 = sand.u32 %s179, 1
          %s811 = smul.addr %s810, 32
          %s812 = scalar_lea.vmem [#allocation2], %s811
        $region108: #{tpu_custom_call.1} parent=103 // pred_fallthru
          _
      $region104: #{tpu_custom_call.1} parent=5 // pred_fallthru
        _
    $region6: #{tpu_custom_call.1} parent=1 // loop_footer
      %s17 = sadd.s32 1, %s13
    $region7: #{tpu_custom_call.1} parent=1 // loop_footer_branch
      %12 = sbr.rel target = $region3
    $region8: #{tpu_custom_call.1} parent=1 // loop_exit
      _

</llo_original>
